<compile_context>
chip_gen: v7x
topology: tpu7x:2x2x1
jax: 0.10.0
libtpu: 0.0.40
codegen_flags: <defaults>
</compile_context>

<pallas_src>
import functools

import jax
import jax.numpy as jnp
from jax.experimental import pallas as pl
from jax.experimental.pallas import tpu as pltpu


_LANE = 128


def _vmem_capacity_bytes():
    """Per-core VMEM capacity; conservative (v7x) fallback if the query fails."""
    try:
        cap = int(getattr(pltpu.get_tpu_info(), "vmem_capacity_bytes", 0))
        if cap > 0:
            return cap
    except Exception:
        pass
    return 64 * 1024 * 1024


def _vmem_block_bytes(shape, dtype):
    """VMEM footprint of one block, accounting for (sublane, lane) padding."""
    itemsize = jnp.dtype(dtype).itemsize
    sub_mult = max(8, 32 // itemsize)
    lead = 1
    for d in shape[:-2]:
        lead *= int(d)
    sub = int(shape[-2]) if len(shape) >= 2 else 1
    lane = int(shape[-1])
    sub_p = -(-sub // sub_mult) * sub_mult
    lane_p = -(-lane // _LANE) * _LANE
    return lead * sub_p * lane_p * itemsize


def _pick_spatial_tile(Sp, Cp, itemsize, block_bytes, sub_mult):
    """Pick lane tile TS (multiple of 128 unless full-extent) and padded S.

    Returns (TS, Sp_pad) with TS | Sp_pad.  Prefers a clean divisor of Sp (no
    padding); otherwise zero-pads Sp to a 512 multiple so blocks always stay
    within the VMEM block budget (v7x-safe).
    """
    cpad = -(-Cp // sub_mult) * sub_mult
    max_lanes = max(_LANE, (block_bytes // (cpad * itemsize)) // _LANE * _LANE)
    if Sp <= max_lanes:
        return Sp, Sp                          # single full-extent tile per batch
    t = max_lanes
    t_min = max(_LANE, (max_lanes // 4) // _LANE * _LANE)
    while t >= t_min:
        if Sp % t == 0:
            return t, Sp
        t -= _LANE
    sp_pad = -(-Sp // 512) * 512               # pooling-safe zero padding
    t = max_lanes
    while t >= _LANE:
        if sp_pad % t == 0:
            return t, sp_pad
        t -= _LANE
    return _LANE, sp_pad


# ----------------------------- kernel -----------------------------------------


def _se_kernel(x_ref, w1_ref, b1_ref, w2_ref, b2_ref, o_ref,
               psum_ref, gate_ref, *, inv_s):
    phase = pl.program_id(1)
    s = pl.program_id(2)
    n_s = pl.num_programs(2)

    # ---- phase 0: pooled-sum accumulation (channels stay on the sublane axis
    #      so the lane-axis reduce needs no relayout), plus the excitation FCs
    #      on the last S tile of this batch (hidden under the streaming DMA).
    @pl.when(phase == 0)
    def _pool_and_excite():
        @pl.when(s == 0)
        def _init():
            psum_ref[...] = jnp.zeros_like(psum_ref)

        psum_ref[...] += jnp.sum(x_ref[...].astype(jnp.float32), axis=-1,
                                 keepdims=True)                       # (1, Cp, 1)

        @pl.when(s == n_s - 1)
        def _excite():
            cp = psum_ref.shape[1]
            # Lane-broadcast the pooled column so both FCs are plain
            # (rows, K) @ (K, 128) MXU matmuls (all 128 columns identical).
            pooled = jnp.broadcast_to(psum_ref[...][0] * inv_s, (cp, _LANE))
            y1 = jnp.dot(w1_ref[...].astype(jnp.float32), pooled,
                         preferred_element_type=jnp.float32) + b1_ref[...]
            y1 = jnp.maximum(y1, 0.0)                                 # (Cr, 128)
            y2 = jnp.dot(w2_ref[...].astype(jnp.float32), y1,
                         preferred_element_type=jnp.float32)[:, 0:1] + b2_ref[...]
            gate_ref[...] = jax.nn.sigmoid(y2)[None]                  # (1, Cp, 1)

    # ---- phase 1: re-stream the same x tiles (still VMEM-resident when
    #      n_s == 1) and rescale; stores stay full-lane / unmasked.
    @pl.when(phase == 1)
    def _scale():
        g = gate_ref[...]
        if o_ref.dtype != jnp.float32:
            g = g.astype(o_ref.dtype)   # low-precision x: multiply in x's dtype
        o_ref[...] = (x_ref[...] * g).astype(o_ref.dtype)


# ----------------------------- wrapper -----------------------------------------


def se_block_pallas(x, w1, b1, w2, b2, *, block_bytes=None):
    """SEBlock forward. x: (B, C, D, H, W); w1: (Cr, C), b1: (Cr,), w2: (C, Cr), b2: (C,)."""
    B, C, D, H, W = x.shape
    S = D * H * W
    Cr = w1.shape[0]
    dtype = x.dtype
    itemsize = jnp.dtype(dtype).itemsize
    sub_mult = max(8, 32 // itemsize)

    # --- dtype-aware small-C sublane packing: (B, C, S) -> (B, C*k, S/k) -------
    k = 1
    if C < sub_mult and sub_mult % C == 0:
        k = sub_mult // C
        while k > 1 and S % k != 0:
            k //= 2
    Cp, Sp = C * k, S // k
    x_p = x.reshape(B, Cp, Sp)

    # Channels-on-sublane ("column") orientation end-to-end; packing folded into
    # repeated FC weights: y1 = relu(W1p @ pooled + b1), gate = sigmoid(W2p @ y1 + b2p).
    w1p = w1 if k == 1 else jnp.repeat(w1, k, axis=1)            # (Cr, Cp)
    w2p = w2 if k == 1 else jnp.repeat(w2, k, axis=0)            # (Cp, Cr)
    b2p = b2 if k == 1 else jnp.repeat(b2, k)                    # (Cp,)
    b1c = b1.reshape(Cr, 1).astype(jnp.float32)
    b2c = b2p.reshape(Cp, 1).astype(jnp.float32)
    inv_s = 1.0 / float(S)

    # --- generation-aware block budget (2 in + 2 out buffers < 2/3 of VMEM) ----
    vmem_cap = _vmem_capacity_bytes()
    if block_bytes is None:
        block_bytes = vmem_cap // 6
    block_bytes = max(16 * 1024, min(int(block_bytes), vmem_cap // 6))

    TS, Sp_pad = _pick_spatial_tile(Sp, Cp, itemsize, block_bytes, sub_mult)
    if Sp_pad != Sp:
        # Zero padding is pooling-safe (we divide by the true S) and scale-safe
        # (padded zeros stay zero and are sliced off below).
        x_p = jnp.pad(x_p, ((0, 0), (0, 0), (0, Sp_pad - Sp)))
    nS = Sp_pad // TS

    blk_bytes = _vmem_block_bytes((1, Cp, TS), dtype)
    w_bytes = (_vmem_block_bytes((Cr, Cp), w1p.dtype)
               + _vmem_block_bytes((Cp, Cr), w2p.dtype)
               + _vmem_block_bytes((Cr, 1), jnp.float32)
               + _vmem_block_bytes((Cp, 1), jnp.float32))
    scratch_bytes = 2 * _vmem_block_bytes((1, Cp, 1), jnp.float32)
    vmem_limit = int(max(4 * blk_bytes + 2 * w_bytes + scratch_bytes + (2 << 20),
                         24 << 20))

    out_p = pl.pallas_call(
        functools.partial(_se_kernel, inv_s=inv_s),
        out_shape=jax.ShapeDtypeStruct((B, Cp, Sp_pad), dtype),
        grid_spec=pltpu.PrefetchScalarGridSpec(
            num_scalar_prefetch=0,
            # grid = (batch, phase, spatial tile). Per batch: phase 0 pools and
            # excites into VMEM scratch, phase 1 rescales -> the gate never
            # touches HBM and the pipeline stays primed across the transition.
            grid=(B, 2, nS),
            in_specs=[
                pl.BlockSpec((1, Cp, TS), lambda b, p, s: (b, 0, s)),
                pl.BlockSpec((Cr, Cp), lambda b, p, s: (0, 0)),
                pl.BlockSpec((Cr, 1), lambda b, p, s: (0, 0)),
                pl.BlockSpec((Cp, Cr), lambda b, p, s: (0, 0)),
                pl.BlockSpec((Cp, 1), lambda b, p, s: (0, 0)),
            ],
            # During phase 0 the out index stays pinned at this batch's first
            # tile, so the (not-yet-written) block is never flushed; phase 1
            # then writes every tile exactly once before its writeback.
            out_specs=pl.BlockSpec((1, Cp, TS), lambda b, p, s: (b, 0, p * s)),
            scratch_shapes=[pltpu.VMEM((1, Cp, 1), jnp.float32),   # pooled sums
                            pltpu.VMEM((1, Cp, 1), jnp.float32)],  # gate
        ),
        compiler_params=pltpu.CompilerParams(
            dimension_semantics=("parallel", "arbitrary", "arbitrary"),
            vmem_limit_bytes=vmem_limit),
        cost_estimate=pl.CostEstimate(
            flops=int(2 * B * Cp * Sp_pad + 4 * B * Cr * Cp * _LANE),
            transcendentals=int(B * Cp * _LANE),
            bytes_accessed=int(3 * B * Cp * Sp_pad * itemsize)),
    )(x_p, w1p, b1c, w2p, b2c)

    if Sp_pad != Sp:
        out_p = out_p[:, :, :Sp]
    return out_p.reshape(B, C, D, H, W)


def se_block_ref(x, w1, b1, w2, b2):
    """Pure-JAX reference matching the PyTorch forward exactly."""
    B, C = x.shape[:2]
    y = jnp.mean(x, axis=(2, 3, 4))                  # AdaptiveAvgPool3d(1) + view
    y = jax.nn.relu(y @ w1.T + b1)                   # fc1 + ReLU
    y = jax.nn.sigmoid(y @ w2.T + b2)                # fc2 + Sigmoid
    return x * y.reshape(B, C, 1, 1, 1)              # channel-wise rescale


if __name__ == "__main__":
    key = jax.random.PRNGKey(0)

    def make_params(kk, C, Cr):
        kw1, kb1, kw2, kb2 = jax.random.split(kk, 4)
        bound1 = 1.0 / float(C) ** 0.5
        w1 = jax.random.uniform(kw1, (Cr, C), jnp.float32, -bound1, bound1)
        b1 = jax.random.uniform(kb1, (Cr,), jnp.float32, -bound1, bound1)
        bound2 = 1.0 / float(Cr) ** 0.5
        w2 = jax.random.uniform(kw2, (C, Cr), jnp.float32, -bound2, bound2)
        b2 = jax.random.uniform(kb2, (C,), jnp.float32, -bound2, bound2)
        return w1, b1, w2, b2

    def check(name, x, params, **kw):
        out = se_block_pallas(x, *params, **kw)
        jax.block_until_ready(out)
        ref = se_block_ref(x, *params)
        assert out.shape == x.shape, name
        assert jnp.allclose(out, ref, atol=2e-5, rtol=2e-5), f"{name} mismatch"

    # case 1: small C (sublane packing) + whole batch row resident (nS == 1).
    kx, kp, key = jax.random.split(key, 3)
    x = jax.random.normal(kx, (2, 4, 8, 8, 8), dtype=jnp.float32)      # S = 512
    check("small/fused", x, make_params(kp, 4, 2))

    # case 2: larger C; a small block budget forces the tiled two-phase path.
    kx, kp, key = jax.random.split(key, 3)
    x = jax.random.normal(kx, (2, 256, 8, 16, 16), dtype=jnp.float32)  # S = 2048
    check("tiled", x, make_params(kp, 256, 64), block_bytes=256 * 1024)

    # case 3: non-128-aligned spatial extent exercises the zero-padding fallback.
    kx, kp, key = jax.random.split(key, 3)
    x = jax.random.normal(kx, (2, 16, 5, 6, 10), dtype=jnp.float32)    # S = 300
    check("padded", x, make_params(kp, 16, 8), block_bytes=16 * 1024)

    print("KERNEL_OK")
</pallas_src>

<mosaic_0001>
module attributes {stable_mosaic.version = 11 : i64} {
  func.func @_se_kernel(%arg0: i32, %arg1: i32, %arg2: i32, %arg3: memref<1x8x256xf32, #tpu.memory_space<vmem>>, %arg4: memref<2x8xf32, #tpu.memory_space<vmem>>, %arg5: memref<2x1xf32, #tpu.memory_space<vmem>>, %arg6: memref<8x2xf32, #tpu.memory_space<vmem>>, %arg7: memref<8x1xf32, #tpu.memory_space<vmem>>, %arg8: memref<1x8x256xf32, #tpu.memory_space<vmem>>, %arg9: memref<1x8x1xf32, #tpu.memory_space<vmem>>, %arg10: memref<1x8x1xf32, #tpu.memory_space<vmem>>) attributes {dimension_semantics = [#tpu.dimension_semantics<parallel>, #tpu.dimension_semantics<arbitrary>, #tpu.dimension_semantics<arbitrary>], iteration_bounds = array<i64: 2, 2, 1>, scalar_prefetch = 0 : i64, scratch_operands = 2 : i64, tpu.core_type = #tpu.core_type<tc>, window_params = [{transform_indices = @transform_0, window_bounds = array<i64: 1, 8, 256>}, {pipeline_mode = #tpu.pipeline_mode<synchronous>, transform_indices = @transform_1, window_bounds = array<i64: 2, 8>}, {pipeline_mode = #tpu.pipeline_mode<synchronous>, transform_indices = @transform_2, window_bounds = array<i64: 2, 1>}, {pipeline_mode = #tpu.pipeline_mode<synchronous>, transform_indices = @transform_3, window_bounds = array<i64: 8, 2>}, {pipeline_mode = #tpu.pipeline_mode<synchronous>, transform_indices = @transform_4, window_bounds = array<i64: 8, 1>}, {transform_indices = @transform_5, window_bounds = array<i64: 1, 8, 256>}]} {
    %c0_i32 = arith.constant 0 : i32
    %0 = arith.cmpi eq, %arg1, %c0_i32 : i32
    %1 = arith.extui %0 : i1 to i32
    %c0_i32_0 = arith.constant 0 : i32
    %2 = arith.cmpi ne, %1, %c0_i32_0 : i32
    scf.if %2 {
      %c0_i32_2 = arith.constant 0 : i32
      %6 = arith.cmpi eq, %arg2, %c0_i32_2 : i32
      %7 = arith.extui %6 : i1 to i32
      %c0_i32_3 = arith.constant 0 : i32
      %8 = arith.cmpi ne, %7, %c0_i32_3 : i32
      scf.if %8 {
        %cst_14 = arith.constant 0.000000e+00 : f32
        %18 = vector.broadcast %cst_14 : f32 to vector<1x8x1xf32>
        %c0_15 = arith.constant 0 : index
        %c0_16 = arith.constant 0 : index
        %c0_17 = arith.constant 0 : index
        %19 = vector.load %arg9[%c0_15, %c0_16, %c0_17] : memref<1x8x1xf32, #tpu.memory_space<vmem>>, vector<1x8x1xf32>
        tpu.vector_store %arg9[%c0_15, %c0_16, %c0_17], %18 {strides = array<i32>} : memref<1x8x1xf32, #tpu.memory_space<vmem>>, vector<1x8x1xf32>,
      } else {
      }
      %c0 = arith.constant 0 : index
      %c0_4 = arith.constant 0 : index
      %c0_5 = arith.constant 0 : index
      %9 = vector.load %arg9[%c0, %c0_4, %c0_5] : memref<1x8x1xf32, #tpu.memory_space<vmem>>, vector<1x8x1xf32>
      %c0_6 = arith.constant 0 : index
      %c0_7 = arith.constant 0 : index
      %c0_8 = arith.constant 0 : index
      %10 = vector.load %arg3[%c0_6, %c0_7, %c0_8] : memref<1x8x256xf32, #tpu.memory_space<vmem>>, vector<1x8x256xf32>
      %cst = arith.constant dense<0.000000e+00> : vector<1x8xf32>
      %11 = vector.multi_reduction <add>, %10, %cst [2] : vector<1x8x256xf32> to vector<1x8xf32>
      %12 = vector.shape_cast %11 : vector<1x8xf32> to vector<1x8x1xf32>
      %13 = arith.addf %9, %12 : vector<1x8x1xf32>
      %c0_9 = arith.constant 0 : index
      %c0_10 = arith.constant 0 : index
      %c0_11 = arith.constant 0 : index
      %14 = vector.load %arg9[%c0_9, %c0_10, %c0_11] : memref<1x8x1xf32, #tpu.memory_space<vmem>>, vector<1x8x1xf32>
      tpu.vector_store %arg9[%c0_9, %c0_10, %c0_11], %13 {strides = array<i32>} : memref<1x8x1xf32, #tpu.memory_space<vmem>>, vector<1x8x1xf32>,
      %c0_i32_12 = arith.constant 0 : i32
      %15 = arith.cmpi eq, %arg2, %c0_i32_12 : i32
      %16 = arith.extui %15 : i1 to i32
      %c0_i32_13 = arith.constant 0 : i32
      %17 = arith.cmpi ne, %16, %c0_i32_13 : i32
      scf.if %17 {
        %c0_14 = arith.constant 0 : index
        %c0_15 = arith.constant 0 : index
        %c0_16 = arith.constant 0 : index
        %18 = vector.load %arg9[%c0_14, %c0_15, %c0_16] : memref<1x8x1xf32, #tpu.memory_space<vmem>>, vector<1x8x1xf32>
        %19 = vector.shape_cast %18 : vector<1x8x1xf32> to vector<8x1xf32>
        %cst_17 = arith.constant 0.001953125 : f32
        %20 = vector.broadcast %cst_17 : f32 to vector<8x1xf32>
        %21 = arith.mulf %19, %20 : vector<8x1xf32>
        %22 = vector.shape_cast %21 : vector<8x1xf32> to vector<8x1xf32>
        %23 = vector.broadcast %22 : vector<8x1xf32> to vector<8x128xf32>
        %c0_18 = arith.constant 0 : index
        %c0_19 = arith.constant 0 : index
        %24 = vector.load %arg4[%c0_18, %c0_19] : memref<2x8xf32, #tpu.memory_space<vmem>>, vector<2x8xf32>
        %cst_20 = arith.constant dense<0.000000e+00> : vector<2x128xf32>
        %25 = tpu.matmul %24, %23, %cst_20 {dimension_numbers = #tpu.dot_dimension_numbers<[1], [0], [0], [1], [0, 0, 1, 1], [], []>} : vector<2x8xf32>, vector<8x128xf32>, vector<2x128xf32> -> vector<2x128xf32>
        %c0_21 = arith.constant 0 : index
        %c0_22 = arith.constant 0 : index
        %26 = vector.load %arg5[%c0_21, %c0_22] : memref<2x1xf32, #tpu.memory_space<vmem>>, vector<2x1xf32>
        %27 = vector.broadcast %26 : vector<2x1xf32> to vector<2x128xf32>
        %28 = arith.addf %25, %27 : vector<2x128xf32>
        %cst_23 = arith.constant 0.000000e+00 : f32
        %29 = vector.broadcast %cst_23 : f32 to vector<2x128xf32>
        %30 = arith.maximumf %28, %29 : vector<2x128xf32>
        %c0_24 = arith.constant 0 : index
        %c0_25 = arith.constant 0 : index
        %31 = vector.load %arg6[%c0_24, %c0_25] : memref<8x2xf32, #tpu.memory_space<vmem>>, vector<8x2xf32>
        %cst_26 = arith.constant dense<0.000000e+00> : vector<8x128xf32>
        %32 = tpu.matmul %31, %30, %cst_26 {dimension_numbers = #tpu.dot_dimension_numbers<[1], [0], [0], [1], [0, 0, 1, 1], [], []>} : vector<8x2xf32>, vector<2x128xf32>, vector<8x128xf32> -> vector<8x128xf32>
        %33 = vector.extract_strided_slice %32 {offsets = [0, 0], sizes = [8, 1], strides = [1, 1]} : vector<8x128xf32> to vector<8x1xf32>
        %c0_27 = arith.constant 0 : index
        %c0_28 = arith.constant 0 : index
        %34 = vector.load %arg7[%c0_27, %c0_28] : memref<8x1xf32, #tpu.memory_space<vmem>>, vector<8x1xf32>
        %35 = arith.addf %33, %34 : vector<8x1xf32>
        %36 = arith.negf %35 : vector<8x1xf32>
        %37 = math.exp %36 : vector<8x1xf32>
        %cst_29 = arith.constant 1.000000e+00 : f32
        %38 = vector.broadcast %cst_29 : f32 to vector<8x1xf32>
        %39 = arith.addf %38, %37 : vector<8x1xf32>
        %40 = arith.divf %38, %39 : vector<8x1xf32>
        %41 = vector.shape_cast %40 : vector<8x1xf32> to vector<1x8x1xf32>
        %c0_30 = arith.constant 0 : index
        %c0_31 = arith.constant 0 : index
        %c0_32 = arith.constant 0 : index
        %42 = vector.load %arg10[%c0_30, %c0_31, %c0_32] : memref<1x8x1xf32, #tpu.memory_space<vmem>>, vector<1x8x1xf32>
        tpu.vector_store %arg10[%c0_30, %c0_31, %c0_32], %41 {strides = array<i32>} : memref<1x8x1xf32, #tpu.memory_space<vmem>>, vector<1x8x1xf32>,
      } else {
      }
    } else {
    }
    %c1_i32 = arith.constant 1 : i32
    %3 = arith.cmpi eq, %arg1, %c1_i32 : i32
    %4 = arith.extui %3 : i1 to i32
    %c0_i32_1 = arith.constant 0 : i32
    %5 = arith.cmpi ne, %4, %c0_i32_1 : i32
    scf.if %5 {
      %c0 = arith.constant 0 : index
      %c0_2 = arith.constant 0 : index
      %c0_3 = arith.constant 0 : index
      %6 = vector.load %arg10[%c0, %c0_2, %c0_3] : memref<1x8x1xf32, #tpu.memory_space<vmem>>, vector<1x8x1xf32>
      %c0_4 = arith.constant 0 : index
      %c0_5 = arith.constant 0 : index
      %c0_6 = arith.constant 0 : index
      %7 = vector.load %arg3[%c0_4, %c0_5, %c0_6] : memref<1x8x256xf32, #tpu.memory_space<vmem>>, vector<1x8x256xf32>
      %8 = vector.broadcast %6 : vector<1x8x1xf32> to vector<1x8x256xf32>
      %9 = arith.mulf %7, %8 : vector<1x8x256xf32>
      %c0_7 = arith.constant 0 : index
      %c0_8 = arith.constant 0 : index
      %c0_9 = arith.constant 0 : index
      %10 = vector.load %arg8[%c0_7, %c0_8, %c0_9] : memref<1x8x256xf32, #tpu.memory_space<vmem>>, vector<1x8x256xf32>
      tpu.vector_store %arg8[%c0_7, %c0_8, %c0_9], %9 {strides = array<i32>} : memref<1x8x256xf32, #tpu.memory_space<vmem>>, vector<1x8x256xf32>,
    } else {
    }
    return
  }
  func.func @transform_0(%arg0: i32, %arg1: i32, %arg2: i32) -> (i32, i32, i32) {
    %c0_i32 = arith.constant 0 : i32
    %c0_i32_0 = arith.constant 0 : i32
    return %arg0, %c0_i32, %arg2 : i32, i32, i32
  }
  func.func @transform_1(%arg0: i32, %arg1: i32, %arg2: i32) -> (i32, i32) {
    %c0_i32 = arith.constant 0 : i32
    %c0_i32_0 = arith.constant 0 : i32
    %c0_i32_1 = arith.constant 0 : i32
    return %c0_i32, %c0_i32_0 : i32, i32
  }
  func.func @transform_2(%arg0: i32, %arg1: i32, %arg2: i32) -> (i32, i32) {
    %c0_i32 = arith.constant 0 : i32
    %c0_i32_0 = arith.constant 0 : i32
    %c0_i32_1 = arith.constant 0 : i32
    return %c0_i32, %c0_i32_0 : i32, i32
  }
  func.func @transform_3(%arg0: i32, %arg1: i32, %arg2: i32) -> (i32, i32) {
    %c0_i32 = arith.constant 0 : i32
    %c0_i32_0 = arith.constant 0 : i32
    %c0_i32_1 = arith.constant 0 : i32
    return %c0_i32, %c0_i32_0 : i32, i32
  }
  func.func @transform_4(%arg0: i32, %arg1: i32, %arg2: i32) -> (i32, i32) {
    %c0_i32 = arith.constant 0 : i32
    %c0_i32_0 = arith.constant 0 : i32
    %c0_i32_1 = arith.constant 0 : i32
    return %c0_i32, %c0_i32_0 : i32, i32
  }
  func.func @transform_5(%arg0: i32, %arg1: i32, %arg2: i32) -> (i32, i32, i32) {
    %0 = arith.muli %arg1, %arg2 : i32
    %c0_i32 = arith.constant 0 : i32
    %c0_i32_0 = arith.constant 0 : i32
    return %arg0, %c0_i32, %0 : i32, i32, i32
  }
}

</mosaic_0001>

<llo_original>
// kernel: tpu_custom_call.1
$region0: #{tpu_custom_call.1}
  #allocation0 [shape = 'u32[]', space=smem, size = 0x4, offset = 0x4, fixed_abs, tag = 'smem constant byte address 0x4 - core index']
  #allocation1 [shape = 'u32[144,128]{1,0:T(1,128)}', space=vmem, size = 0x12000, scoped, tag = 'internal scratch']
  #allocation2 [shape = 'f32[1,8,1]{2,1,0:T(8,128)}', space=vmem, size = 0x1000, scoped, tag = 'scratch operand']
  #allocation3 [shape = 'f32[1,8,1]{2,1,0:T(8,128)}', space=vmem, size = 0x1000, scoped, tag = 'scratch operand']
  %s0 = inlined_call_operand.hbm [shape: f32[2,8,256], index: 0, kind: input, shape index: {}]
  %s1 = inlined_call_operand.vmem [shape: f32[2,8], index: 1, kind: input, shape index: {}]
  %s2 = inlined_call_operand.vmem [shape: f32[2,1], index: 2, kind: input, shape index: {}]
  %s3 = inlined_call_operand.vmem [shape: f32[8,2], index: 3, kind: input, shape index: {}]
  %s4 = inlined_call_operand.vmem [shape: f32[8,1], index: 4, kind: input, shape index: {}]
  %s5 = inlined_call_operand.hbm [shape: f32[2,8,256], index: 5, kind: output, shape index: {}]
  %s6 = sld [smem:[#allocation0]]
  $region73: #{tpu_custom_call.1} parent=0
    _
  %s8 = ssub.s32 1, %s6
  %s9 = scalar_select 0, %s8, %s6
  $region1: #{tpu_custom_call.1} parent=0
    #allocation4 [shape = 'u8[16384]{0}', space=vmem, size = 0x4000, scoped, tag = 'input window, operand 0']
    #allocation5 [shape = 's32[2]{0}', space=sflag, size = 0x8, scoped, tag = 'scoped memory for tpu_custom_call.1']
    #allocation6 [shape = 's32[2]{0}', space=sflag, size = 0x8, scoped, tag = 'scoped memory for tpu_custom_call.1']
    #allocation7 [shape = 'u8[16384]{0}', space=vmem, size = 0x4000, scoped, tag = 'output window, operand 0']
    %10 = vsyncpa [#allocation5], 0
    %s11 = scalar_lea.sflag [#allocation5], 1
    %12 = vsyncpa %s11, 0
    %13 = vsyncpa [#allocation6], 0
    %s14 = scalar_lea.sflag [#allocation6], 1
    %15 = vsyncpa %s14, 0
    loop: start=0, step=1, limit=6
    $region2: #{tpu_custom_call.1} parent=1 // loop_pre_header
      _
    $region3: #{tpu_custom_call.1} parent=1 // loop_header
      %s17 = sphi 0, %s21
      %p18 = scmp.ge.s32.totalorder %s17, 6
      %s24 = sphi 0, %s43
      %s25 = sphi 0, %s39
      %s26 = sphi 0, %s35
      %s27 = sphi 0, %s24
      %s28 = sphi 0, %s25
      %s29 = sphi 0, %s26
      %s30 = sphi 0, %s27
      %s31 = sphi 0, %s28
      %s32 = sphi 0, %s29
      %s48 = sphi 0, %s50
      %s51 = sphi 0, %s48
      %s52 = sphi 0, %s51
      %s68 = sphi 0, %s52
      %s72 = sphi 0, %s72
      %s74 = sphi 0, %s72
      %s75 = sphi 0, %s74
      %s89 = sphi 0, %s75
      %s93 = sphi 0, %s93
      %s95 = sphi 0, %s93
      %s96 = sphi 0, %s95
      %s110 = sphi 0, %s96
      %s114 = sphi 0, %s114
      %s116 = sphi 0, %s114
      %s117 = sphi 0, %s116
      %s131 = sphi 0, %s117
      %s135 = sphi 0, %s135
      %s137 = sphi 0, %s135
      %s138 = sphi 0, %s137
      %s152 = sphi 0, %s138
      %s162 = sphi 0, %s164
      %s165 = sphi 0, %s162
      %s166 = sphi 0, %s165
      %s182 = sphi 0, %s166
    $region4: #{tpu_custom_call.1} parent=1 // loop_header_branch
      %20 = sbr.rel (%p18) target = $region8
    $region5: #{tpu_custom_call.1} parent=1 // loop_body
      %s22 = ssub.s32 %s17, 1
      %s23 = ssub.s32 %s17, 2
      %s33 = sadd.s32 1, %s26
      %p34 = scmp.ge.s32.totalorder %s33, 1
      %s35 = scalar_select %p34, 0, %s33
      %s36 = sadd.s32 1, %s25
      %s37 = scalar_select %p34, %s36, %s25
      %p38 = scmp.ge.s32.totalorder %s37, 2
      %s39 = scalar_select %p38, 0, %s37
      %s40 = sadd.s32 1, %s24
      %s41 = scalar_select %p38, %s40, %s24
      %p42 = scmp.ge.s32.totalorder %s41, 2
      %s43 = scalar_select %p42, 0, %s41
      %s44 = ssub.s32 %s24, %s43
      %s45 = ssub.s32 %s26, %s35
      %s46 = sor.u32 %s44, %s45
      %p47 = scmp.eq.s32.totalorder %s46, 0
      %s49 = sadd.s32 %s48, 1
      %s50 = scalar_select %p47, %s48, %s49
      %p53 = pneg %p47
      %p54 = scmp.eq.s32.totalorder %s17, 3
      %p55 = por %p53, %p54
      %p56 = scmp.ne.s32.totalorder %s48, %s51
      %p57 = scmp.eq.s32.totalorder %s17, 0
      %p58 = por %p56, %p57
      %p59 = scmp.ne.s32.totalorder %s48, %s51
      %p60 = scmp.eq.s32.totalorder %s22, 3
      %p61 = por %p59, %p60
      %p62 = scmp.ne.s32.totalorder %s51, %s52
      %p63 = scmp.eq.s32.totalorder %s22, 0
      %p64 = por %p62, %p63
      %p65 = scmp.ne.s32.totalorder %s51, %s52
      %p66 = scmp.eq.s32.totalorder %s23, 3
      %p67 = por %p65, %p66
      %p69 = scmp.ne.s32.totalorder %s52, %s68
      %p70 = scmp.eq.s32.totalorder %s23, 0
      %p71 = por %p69, %p70
      %s73 = sadd.s32 %s72, 1
      %p76 = scmp.eq.s32.totalorder %s17, 3
      %p77 = scmp.ne.s32.totalorder %s72, %s74
      %p78 = scmp.eq.s32.totalorder %s17, 0
      %p79 = por %p77, %p78
      %p80 = scmp.ne.s32.totalorder %s72, %s74
      %p81 = scmp.eq.s32.totalorder %s22, 3
      %p82 = por %p80, %p81
      %p83 = scmp.ne.s32.totalorder %s74, %s75
      %p84 = scmp.eq.s32.totalorder %s22, 0
      %p85 = por %p83, %p84
      %p86 = scmp.ne.s32.totalorder %s74, %s75
      %p87 = scmp.eq.s32.totalorder %s23, 3
      %p88 = por %p86, %p87
      %p90 = scmp.ne.s32.totalorder %s75, %s89
      %p91 = scmp.eq.s32.totalorder %s23, 0
      %p92 = por %p90, %p91
      %s94 = sadd.s32 %s93, 1
      %p97 = scmp.eq.s32.totalorder %s17, 3
      %p98 = scmp.ne.s32.totalorder %s93, %s95
      %p99 = scmp.eq.s32.totalorder %s17, 0
      %p100 = por %p98, %p99
      %p101 = scmp.ne.s32.totalorder %s93, %s95
      %p102 = scmp.eq.s32.totalorder %s22, 3
      %p103 = por %p101, %p102
      %p104 = scmp.ne.s32.totalorder %s95, %s96
      %p105 = scmp.eq.s32.totalorder %s22, 0
      %p106 = por %p104, %p105
      %p107 = scmp.ne.s32.totalorder %s95, %s96
      %p108 = scmp.eq.s32.totalorder %s23, 3
      %p109 = por %p107, %p108
      %p111 = scmp.ne.s32.totalorder %s96, %s110
      %p112 = scmp.eq.s32.totalorder %s23, 0
      %p113 = por %p111, %p112
      %s115 = sadd.s32 %s114, 1
      %p118 = scmp.eq.s32.totalorder %s17, 3
      %p119 = scmp.ne.s32.totalorder %s114, %s116
      %p120 = scmp.eq.s32.totalorder %s17, 0
      %p121 = por %p119, %p120
      %p122 = scmp.ne.s32.totalorder %s114, %s116
      %p123 = scmp.eq.s32.totalorder %s22, 3
      %p124 = por %p122, %p123
      %p125 = scmp.ne.s32.totalorder %s116, %s117
      %p126 = scmp.eq.s32.totalorder %s22, 0
      %p127 = por %p125, %p126
      %p128 = scmp.ne.s32.totalorder %s116, %s117
      %p129 = scmp.eq.s32.totalorder %s23, 3
      %p130 = por %p128, %p129
      %p132 = scmp.ne.s32.totalorder %s117, %s131
      %p133 = scmp.eq.s32.totalorder %s23, 0
      %p134 = por %p132, %p133
      %s136 = sadd.s32 %s135, 1
      %p139 = scmp.eq.s32.totalorder %s17, 3
      %p140 = scmp.ne.s32.totalorder %s135, %s137
      %p141 = scmp.eq.s32.totalorder %s17, 0
      %p142 = por %p140, %p141
      %p143 = scmp.ne.s32.totalorder %s135, %s137
      %p144 = scmp.eq.s32.totalorder %s22, 3
      %p145 = por %p143, %p144
      %p146 = scmp.ne.s32.totalorder %s137, %s138
      %p147 = scmp.eq.s32.totalorder %s22, 0
      %p148 = por %p146, %p147
      %p149 = scmp.ne.s32.totalorder %s137, %s138
      %p150 = scmp.eq.s32.totalorder %s23, 3
      %p151 = por %p149, %p150
      %p153 = scmp.ne.s32.totalorder %s138, %s152
      %p154 = scmp.eq.s32.totalorder %s23, 0
      %p155 = por %p153, %p154
      %s156 = smul.u32 %s25, %s26
      %s157 = smul.u32 %s39, %s35
      %s158 = ssub.s32 %s24, %s43
      %s159 = ssub.s32 %s156, %s157
      %s160 = sor.u32 %s158, %s159
      %p161 = scmp.eq.s32.totalorder %s160, 0
      %s163 = sadd.s32 %s162, 1
      %s164 = scalar_select %p161, %s162, %s163
      %p167 = pneg %p161
      %p168 = scmp.eq.s32.totalorder %s17, 3
      %p169 = por %p167, %p168
      %p170 = scmp.ne.s32.totalorder %s162, %s165
      %p171 = scmp.eq.s32.totalorder %s17, 0
      %p172 = por %p170, %p171
      %p173 = scmp.ne.s32.totalorder %s162, %s165
      %p174 = scmp.eq.s32.totalorder %s22, 3
      %p175 = por %p173, %p174
      %p176 = scmp.ne.s32.totalorder %s165, %s166
      %p177 = scmp.eq.s32.totalorder %s22, 0
      %p178 = por %p176, %p177
      %p179 = scmp.ne.s32.totalorder %s165, %s166
      %p180 = scmp.eq.s32.totalorder %s23, 3
      %p181 = por %p179, %p180
      %p183 = scmp.ne.s32.totalorder %s166, %s182
      %p184 = scmp.eq.s32.totalorder %s23, 0
      %p185 = por %p183, %p184
      %p186 = scmp.le.s32.totalorder 1, %s17
      %p187 = scmp.lt.s32.totalorder %s17, 5
      %p188 = pnand %p186, %p187
      %p189 = pneg %p188
      // Predicated region
      $region9: #{tpu_custom_call.1} parent=5 // pred_check
        _
      $region10: #{tpu_custom_call.1} parent=5 // pred_check_branch
        %191 = sbr.rel (%p188) target = $region12
      $region11: #{tpu_custom_call.1} parent=5 // pred_region
        %s192 = ssub.s32 %s17, 1
        // Predicated region
        $region13: #{tpu_custom_call.1} parent=11 // pred_check
          %p193 = pneg %p85
        $region14: #{tpu_custom_call.1} parent=11 // pred_check_branch
          %195 = sbr.rel (%p193) target = $region16
        $region15: #{tpu_custom_call.1} parent=11 // pred_region
          _
        $region16: #{tpu_custom_call.1} parent=11 // pred_fallthru
          _
        // Predicated region
        $region17: #{tpu_custom_call.1} parent=11 // pred_check
          %p196 = pneg %p106
        $region18: #{tpu_custom_call.1} parent=11 // pred_check_branch
          %198 = sbr.rel (%p196) target = $region20
        $region19: #{tpu_custom_call.1} parent=11 // pred_region
          _
        $region20: #{tpu_custom_call.1} parent=11 // pred_fallthru
          _
        // Predicated region
        $region21: #{tpu_custom_call.1} parent=11 // pred_check
          %p199 = pneg %p127
        $region22: #{tpu_custom_call.1} parent=11 // pred_check_branch
          %201 = sbr.rel (%p199) target = $region24
        $region23: #{tpu_custom_call.1} parent=11 // pred_region
          _
        $region24: #{tpu_custom_call.1} parent=11 // pred_fallthru
          _
        // Predicated region
        $region25: #{tpu_custom_call.1} parent=11 // pred_check
          %p202 = pneg %p148
        $region26: #{tpu_custom_call.1} parent=11 // pred_check_branch
          %204 = sbr.rel (%p202) target = $region28
        $region27: #{tpu_custom_call.1} parent=11 // pred_region
          _
        $region28: #{tpu_custom_call.1} parent=11 // pred_fallthru
          _
      $region12: #{tpu_custom_call.1} parent=5 // pred_fallthru
        _
      %p205 = scmp.lt.s32.totalorder %s17, 4
      // Predicated region
      $region29: #{tpu_custom_call.1} parent=5 // pred_check
        %p206 = pneg %p205
      $region30: #{tpu_custom_call.1} parent=5 // pred_check_branch
        %208 = sbr.rel (%p206) target = $region32
      $region31: #{tpu_custom_call.1} parent=5 // pred_region
        // Predicated region
        $region33: #{tpu_custom_call.1} parent=31 // pred_check
          %p209 = pneg %p58
        $region34: #{tpu_custom_call.1} parent=31 // pred_check_branch
          %211 = sbr.rel (%p209) target = $region36
        $region35: #{tpu_custom_call.1} parent=31 // pred_region
          %s212 = sand.u32 %s48, 1
          %s213 = scalar_lea.sflag [#allocation5], %s212
          %s214 = sand.u32 %s48, 1
          %s215 = smul.addr %s214, 16
          %s216 = scalar_lea.vmem [#allocation4], %s215
          %s217 = smul.u32 2, %s26
          %s219 = ssub.s32 256, 256
          %220 = vsyncadd %s213, %s219
          %s221 = smul.addr %s24, 2
          %s222 = sadd.s32 %s217, %s221
          %s223 = smul.addr %s222, 128
          %s224 = scalar_lea.hbm %s0, %s223
          %s226 = sshll.u32 %s216, 4
          %s227 = int_to_ptr.vmem [resolvable:$true] %s226
          %229 = dma.hbm_to_vmem [thread:$0]  %s224, 256, %s227, %s213
        $region36: #{tpu_custom_call.1} parent=31 // pred_fallthru
          _
      $region32: #{tpu_custom_call.1} parent=5 // pred_fallthru
        _
      %p230 = scmp.le.s32.totalorder 1, %s17
      %p231 = scmp.lt.s32.totalorder %s17, 5
      %p232 = pnand %p230, %p231
      %p233 = pneg %p232
      // Predicated region
      $region37: #{tpu_custom_call.1} parent=5 // pred_check
        _
      $region38: #{tpu_custom_call.1} parent=5 // pred_check_branch
        %235 = sbr.rel (%p232) target = $region40
      $region39: #{tpu_custom_call.1} parent=5 // pred_region
        %s236 = ssub.s32 %s17, 1
        %s237 = sand.u32 %s51, 1
        %s238 = scalar_lea.sflag [#allocation5], %s237
        %s239 = sand.u32 %s51, 1
        %s240 = smul.addr %s239, 16
        %s241 = scalar_lea.vmem [#allocation4], %s240
        // Predicated region
        $region41: #{tpu_custom_call.1} parent=39 // pred_check
          %p242 = pneg %p64
        $region42: #{tpu_custom_call.1} parent=39 // pred_check_branch
          %244 = sbr.rel (%p242) target = $region44
        $region43: #{tpu_custom_call.1} parent=39 // pred_region
          %245 = dma.done %s238, 256
        $region44: #{tpu_custom_call.1} parent=39 // pred_fallthru
          _
        %s246 = sand.u32 %s51, 1
        %s247 = scalar_lea.sflag [#allocation5], %s246
        %s248 = sand.u32 %s51, 1
        %s249 = smul.addr %s248, 16
        %s250 = scalar_lea.vmem [#allocation4], %s249
        %p251 = pneg %p64
        %p252 = pneg %p61
        %p253 = pneg %p85
        %p254 = pneg %p82
        %p255 = pneg %p106
        %p256 = pneg %p103
        %p257 = pneg %p127
        %p258 = pneg %p124
        %p259 = pneg %p148
        %p260 = pneg %p145
        %p261 = pneg %p178
        %p262 = pneg %p175
        %s263 = sand.u32 %s165, 1
        %s264 = scalar_lea.sflag [#allocation6], %s263
        %s265 = sand.u32 %s165, 1
        %s266 = smul.addr %s265, 16
        %s267 = scalar_lea.vmem [#allocation7], %s266
        %s268 = smul.u32 2, %s29
        %s269 = smul.u32 %s28, %s29
        %s270 = smul.u32 2, %s269
        %p271 = scmp.eq.s32.totalorder %s28, 0
        // Predicated region
        $region45: #{tpu_custom_call.1} parent=39 // pred_check
          %p272 = pneg %p271
        $region46: #{tpu_custom_call.1} parent=39 // pred_check_branch
          %274 = sbr.rel (%p272) target = $region48
        $region47: #{tpu_custom_call.1} parent=39 // pred_region
          %p275 = scmp.eq.s32.totalorder %s29, 0
          // Predicated region
          $region49: #{tpu_custom_call.1} parent=47 // pred_check
            %p276 = pneg %p275
          $region50: #{tpu_custom_call.1} parent=47 // pred_check_branch
            %278 = sbr.rel (%p276) target = $region52
          $region51: #{tpu_custom_call.1} parent=47 // pred_region
            %vm279 = vcmask 7168
            %280 = vst.msk [vmem:[#allocation2] sm:$0xff] %vm279, 0.0
          $region52: #{tpu_custom_call.1} parent=47 // pred_fallthru
            _
          %v281 = vld [vmem:[#allocation2] sm:$0xff]
          %v282 = vld [vmem:[%s241] sm:$0xff]
          %v283 = vld [vmem:[%s241 + $0x8] sm:$0xff]
          %v284 = vadd.f32 %v282, %v283
          %285 = vadd.xlane.f32.xlu0 %v284
          %v286 = vpop.xlane.xlu0 %285
          %v287 = vadd.f32 %v281, %v286
          %vm288 = vcmask 7168
          %289 = vst.msk [vmem:[#allocation2] sm:$0xff] %vm288, %v287
          // Predicated region
          $region53: #{tpu_custom_call.1} parent=47 // pred_check
            %p290 = pneg %p275
          $region54: #{tpu_custom_call.1} parent=47 // pred_check_branch
            %292 = sbr.rel (%p290) target = $region56
          $region55: #{tpu_custom_call.1} parent=47 // pred_region
            %v293 = vld [vmem:[#allocation2] sm:$0xff]
            %v294 = vmul.f32 %v293, 0.001953125
            %296 = vset.pattern.permute.xlu0 0
            %297 = vperm.xlu0 %296, %v294
            %v298 = vpop.permute.xlu0 %297
            %v300 = vld [vmem:[%s1] sm:$0x3]
            %v301 = vld [vmem:[%s2] sm:$0x3]
            %303 = vset.pattern.permute.xlu0 0
            %304 = vperm.xlu0 %303, %v301
            %v305 = vpop.permute.xlu0 %304
            %vm307 = vcmask 64512
            %v309 = vsel %vm307, %v300, 0
            %311 = vmatprep.subr.mxu0 0.0
            %312 = vmatpush1.msra.mxu0 %v298
            %313 = vmatprep.subr.mxu0 0.0
            %314 = vmatpush1.msra.mxu0 0.0
            %315 = vmatprep.subr.mxu0 0.0
            %316 = vmatpush1.msra.mxu0 0.0
            %317 = vmatprep.subr.mxu0 0.0
            %318 = vmatpush1.msra.mxu0 0.0
            %319 = vmatprep.subr.mxu0 0.0
            %320 = vmatpush1.msra.mxu0 0.0
            %321 = vmatprep.subr.mxu0 0.0
            %322 = vmatpush1.msra.mxu0 0.0
            %323 = vmatprep.subr.mxu0 0.0
            %324 = vmatpush1.msra.mxu0 0.0
            %325 = vmatprep.subr.mxu0 0.0
            %326 = vmatpush1.msra.mxu0 0.0
            %327 = vmatprep.subr.mxu0 0.0
            %328 = vmatpush1.msra.mxu0 0.0
            %329 = vmatprep.subr.mxu0 0.0
            %330 = vmatpush1.msra.mxu0 0.0
            %331 = vmatprep.subr.mxu0 0.0
            %332 = vmatpush1.msra.mxu0 0.0
            %333 = vmatprep.subr.mxu0 0.0
            %334 = vmatpush1.msra.mxu0 0.0
            %335 = vmatprep.subr.mxu0 0.0
            %336 = vmatpush1.msra.mxu0 0.0
            %337 = vmatprep.subr.mxu0 0.0
            %338 = vmatpush1.msra.mxu0 0.0
            %339 = vmatprep.subr.mxu0 0.0
            %340 = vmatpush1.msra.mxu0 0.0
            %341 = vmatprep.subr.mxu0 0.0
            %342 = vmatpush1.msra.mxu0 0.0
            %343 = vmatprep.subr.mxu0 0.0
            %344 = vmatpush1.msra.mxu0 0.0
            %345 = vmatprep.subr.mxu0 0.0
            %346 = vmatpush1.msra.mxu0 0.0
            %347 = vmatprep.subr.mxu0 0.0
            %348 = vmatpush1.msra.mxu0 0.0
            %349 = vmatprep.subr.mxu0 0.0
            %350 = vmatpush1.msra.mxu0 0.0
            %351 = vmatprep.subr.mxu0 0.0
            %352 = vmatpush1.msra.mxu0 0.0
            %353 = vmatprep.subr.mxu0 0.0
            %354 = vmatpush1.msra.mxu0 0.0
            %355 = vmatprep.subr.mxu0 0.0
            %356 = vmatpush1.msra.mxu0 0.0
            %357 = vmatprep.subr.mxu0 0.0
            %358 = vmatpush1.msra.mxu0 0.0
            %359 = vmatprep.subr.mxu0 0.0
            %360 = vmatpush1.msra.mxu0 0.0
            %361 = vmatprep.subr.mxu0 0.0
            %362 = vmatpush1.msra.mxu0 0.0
            %363 = vmatprep.subr.mxu0 0.0
            %364 = vmatpush1.msra.mxu0 0.0
            %365 = vmatprep.subr.mxu0 0.0
            %366 = vmatpush1.msra.mxu0 0.0
            %367 = vmatprep.subr.mxu0 0.0
            %368 = vmatpush1.msra.mxu0 0.0
            %369 = vmatprep.subr.mxu0 0.0
            %370 = vmatpush1.msra.mxu0 0.0
            %371 = vmatprep.subr.mxu0 0.0
            %372 = vmatpush1.msra.mxu0 0.0
            %373 = vmatprep.subr.mxu0 0.0
            %374 = vmatpush1.msra.mxu0 0.0
            %375 = vmatprep.mubr.f32.mxu0 0.0
            %376 = vmatmul.mubr.f32.gmra.mrb[0].mxu0 %v309
            %v377 = vpop.f32.mrb[0].mxu0
            %v378 = vadd.f32 %v305, %v377
            %v379 = vpop.f32.mrb[0].mxu0
            %380 = vdwg.mxu0
            %v381 = vmax.f32 %v378, 0.0
            %v382 = vld [vmem:[%s3] sm:$0xff]
            %vm383 = vcmask 15360
            %v385 = vsel %vm383, %v382, 0
            %vm387 = vcmask 1041408
            %v389 = vsel %vm387, %v381, 0
            %391 = vmatprep.subr.mxu0 0.0
            %392 = vmatpush1.msra.mxu0 %v389
            %393 = vmatprep.subr.mxu0 0.0
            %394 = vmatpush1.msra.mxu0 0.0
            %395 = vmatprep.subr.mxu0 0.0
            %396 = vmatpush1.msra.mxu0 0.0
            %397 = vmatprep.subr.mxu0 0.0
            %398 = vmatpush1.msra.mxu0 0.0
            %399 = vmatprep.subr.mxu0 0.0
            %400 = vmatpush1.msra.mxu0 0.0
            %401 = vmatprep.subr.mxu0 0.0
            %402 = vmatpush1.msra.mxu0 0.0
            %403 = vmatprep.subr.mxu0 0.0
            %404 = vmatpush1.msra.mxu0 0.0
            %405 = vmatprep.subr.mxu0 0.0
            %406 = vmatpush1.msra.mxu0 0.0
            %407 = vmatprep.subr.mxu0 0.0
            %408 = vmatpush1.msra.mxu0 0.0
            %409 = vmatprep.subr.mxu0 0.0
            %410 = vmatpush1.msra.mxu0 0.0
            %411 = vmatprep.subr.mxu0 0.0
            %412 = vmatpush1.msra.mxu0 0.0
            %413 = vmatprep.subr.mxu0 0.0
            %414 = vmatpush1.msra.mxu0 0.0
            %415 = vmatprep.subr.mxu0 0.0
            %416 = vmatpush1.msra.mxu0 0.0
            %417 = vmatprep.subr.mxu0 0.0
            %418 = vmatpush1.msra.mxu0 0.0
            %419 = vmatprep.subr.mxu0 0.0
            %420 = vmatpush1.msra.mxu0 0.0
            %421 = vmatprep.subr.mxu0 0.0
            %422 = vmatpush1.msra.mxu0 0.0
            %423 = vmatprep.subr.mxu0 0.0
            %424 = vmatpush1.msra.mxu0 0.0
            %425 = vmatprep.subr.mxu0 0.0
            %426 = vmatpush1.msra.mxu0 0.0
            %427 = vmatprep.subr.mxu0 0.0
            %428 = vmatpush1.msra.mxu0 0.0
            %429 = vmatprep.subr.mxu0 0.0
            %430 = vmatpush1.msra.mxu0 0.0
            %431 = vmatprep.subr.mxu0 0.0
            %432 = vmatpush1.msra.mxu0 0.0
            %433 = vmatprep.subr.mxu0 0.0
            %434 = vmatpush1.msra.mxu0 0.0
            %435 = vmatprep.subr.mxu0 0.0
            %436 = vmatpush1.msra.mxu0 0.0
            %437 = vmatprep.subr.mxu0 0.0
            %438 = vmatpush1.msra.mxu0 0.0
            %439 = vmatprep.subr.mxu0 0.0
            %440 = vmatpush1.msra.mxu0 0.0
            %441 = vmatprep.subr.mxu0 0.0
            %442 = vmatpush1.msra.mxu0 0.0
            %443 = vmatprep.subr.mxu0 0.0
            %444 = vmatpush1.msra.mxu0 0.0
            %445 = vmatprep.subr.mxu0 0.0
            %446 = vmatpush1.msra.mxu0 0.0
            %447 = vmatprep.subr.mxu0 0.0
            %448 = vmatpush1.msra.mxu0 0.0
            %449 = vmatprep.subr.mxu0 0.0
            %450 = vmatpush1.msra.mxu0 0.0
            %451 = vmatprep.subr.mxu0 0.0
            %452 = vmatpush1.msra.mxu0 0.0
            %453 = vmatprep.subr.mxu0 0.0
            %454 = vmatpush1.msra.mxu0 0.0
            %455 = vmatprep.mubr.f32.mxu0 0.0
            %456 = vmatmul.mubr.f32.gmra.mrb[0].mxu0 %v385
            %v457 = vpop.f32.mrb[0].mxu0
            %v458 = vadd.f32 0.0, %v457
            %v459 = vpop.f32.mrb[0].mxu0
            %460 = vdwg.mxu0
            %v461 = vld [vmem:[%s4] sm:$0xff]
            %v462 = vadd.f32 %v458, %v461
            %v463 = vxor.u32 %v462, 2147483648
            %v464 = vmul.f32 %v463, 1.442695
            %v465 = vpow.pop %v464
            %v466 = vadd.f32 %v465, 1.0
            %v467 = vrcp.pop %v466
            %v468 = vmul.f32 1.0, %v467
            %469 = vst.msk [vmem:[#allocation3] sm:$0xff] %vm288, %v468
          $region56: #{tpu_custom_call.1} parent=47 // pred_fallthru
            _
        $region48: #{tpu_custom_call.1} parent=39 // pred_fallthru
          _
        %p470 = scmp.eq.s32.totalorder %s28, 1
        // Predicated region
        $region57: #{tpu_custom_call.1} parent=39 // pred_check
          %p471 = pneg %p470
        $region58: #{tpu_custom_call.1} parent=39 // pred_check_branch
          %473 = sbr.rel (%p471) target = $region60
        $region59: #{tpu_custom_call.1} parent=39 // pred_region
          %v474 = vld [vmem:[#allocation3] sm:$0xff]
          %v475 = vld [vmem:[%s241] sm:$0xff]
          %v476 = vld [vmem:[%s241 + $0x8] sm:$0xff]
          %478 = vset.pattern.permute.xlu0 0
          %479 = vperm.xlu0 %478, %v474
          %v480 = vpop.permute.xlu0 %479
          %v482 = vmul.f32 %v475, %v480
          %v483 = vmul.f32 %v476, %v480
          %484 = vst [vmem:[%s267] sm:$0xff] %v482
          %485 = vst [vmem:[%s267 + $0x8] sm:$0xff] %v483
        $region60: #{tpu_custom_call.1} parent=39 // pred_fallthru
          _
        %s486 = sand.u32 %s165, 1
        %s487 = scalar_lea.sflag [#allocation6], %s486
        %s488 = sand.u32 %s165, 1
        %s489 = smul.addr %s488, 16
        %s490 = scalar_lea.vmem [#allocation7], %s489
        // Predicated region
        $region61: #{tpu_custom_call.1} parent=39 // pred_check
          %p491 = pneg %p175
        $region62: #{tpu_custom_call.1} parent=39 // pred_check_branch
          %493 = sbr.rel (%p491) target = $region64
        $region63: #{tpu_custom_call.1} parent=39 // pred_region
          %s494 = smul.u32 %s28, %s29
          %s495 = smul.u32 2, %s494
          %s497 = ssub.s32 256, 256
          %498 = vsyncadd %s487, %s497
          %s499 = smul.addr %s27, 2
          %s500 = sadd.s32 %s495, %s499
          %s501 = smul.addr %s500, 128
          %s502 = scalar_lea.hbm %s5, %s501
          %s504 = sshll.u32 %s490, 4
          %s505 = int_to_ptr.vmem [resolvable:$true] %s504
          %507 = dma.vmem_to_hbm [thread:$0]  %s505, 256, %s502, %s487
        $region64: #{tpu_custom_call.1} parent=39 // pred_fallthru
          _
      $region40: #{tpu_custom_call.1} parent=5 // pred_fallthru
        _
      %p508 = scmp.le.s32.totalorder 2, %s17
      // Predicated region
      $region65: #{tpu_custom_call.1} parent=5 // pred_check
        %p509 = pneg %p508
      $region66: #{tpu_custom_call.1} parent=5 // pred_check_branch
        %511 = sbr.rel (%p509) target = $region68
      $region67: #{tpu_custom_call.1} parent=5 // pred_region
        %s512 = ssub.s32 %s17, 2
        // Predicated region
        $region69: #{tpu_custom_call.1} parent=67 // pred_check
          %p513 = pneg %p181
        $region70: #{tpu_custom_call.1} parent=67 // pred_check_branch
          %515 = sbr.rel (%p513) target = $region72
        $region71: #{tpu_custom_call.1} parent=67 // pred_region
          %s516 = sand.u32 %s166, 1
          %s517 = scalar_lea.sflag [#allocation6], %s516
          %s518 = sand.u32 %s166, 1
          %s519 = smul.addr %s518, 16
          %s520 = scalar_lea.vmem [#allocation7], %s519
          %521 = dma.done %s517, 256
        $region72: #{tpu_custom_call.1} parent=67 // pred_fallthru
          _
      $region68: #{tpu_custom_call.1} parent=5 // pred_fallthru
        _
    $region6: #{tpu_custom_call.1} parent=1 // loop_footer
      %s21 = sadd.s32 1, %s17
    $region7: #{tpu_custom_call.1} parent=1 // loop_footer_branch
      %16 = sbr.rel target = $region3
    $region8: #{tpu_custom_call.1} parent=1 // loop_exit
      _
    %522 = vsyncpa [#allocation5], 1
    %s523 = scalar_lea.sflag [#allocation5], 1
    %524 = vsyncpa %s523, 1
    %525 = vsyncpa [#allocation6], 1
    %s526 = scalar_lea.sflag [#allocation6], 1
    %527 = vsyncpa %s526, 1

</llo_original>
